<compile_context>
chip_gen: v7x
topology: tpu7x:2x2x1
jax: 0.10.0
libtpu: 0.0.40
codegen_flags: <defaults>
</compile_context>

<pallas_src>
import functools

import jax
import jax.numpy as jnp
from jax import lax
from jax.experimental import pallas as pl
from jax.experimental.pallas import tpu as pltpu


# Tap offsets (dh, dw) in the same order as the block-diagonal weight rows.
_TAPS = tuple((dh, dw) for dh in (-1, 0, 1) for dw in (-1, 0, 1))


def _decode_block_kernel(x_ref, w1_ref, w2_ref, out_ref, src_ref, slab_ref, *, C):
    """Per-image block.

    x_ref/out_ref : (H, W*C)          image with channels on the lane axis
    w1_ref        : (9*W*C, W*C)      conv1 block-diagonal im2col weights
    w2_ref        : (9*W*C, W*C)      conv2 block-diagonal im2col weights
    src_ref       : (H+2, W*C + 2*C)  zero-haloed staging buffer (VMEM)
    slab_ref      : (H, 9*W*C)        im2col slab (VMEM)
    """
    H, WC = x_ref.shape

    # Zero the staging buffer once: only its 1-pixel halo ring is ever relied
    # upon (the interior is overwritten before each conv).
    src_ref[...] = jnp.zeros_like(src_ref)

    def conv(a, w_ref):
        # Stage `a` inside the zero halo.
        src_ref[1:H + 1, C:WC + C] = a
        # Gather the 9 shifted full-size windows into one im2col slab.
        for t, (dh, dw) in enumerate(_TAPS):
            slab_ref[:, t * WC:(t + 1) * WC] = (
                src_ref[1 + dh:1 + dh + H, C * (1 + dw):C * (1 + dw) + WC])
        # One fused MXU matmul for all 9 taps (f32 accumulate).
        return jnp.dot(slab_ref[...], w_ref[...],
                       preferred_element_type=jnp.float32)

    x = x_ref[...]                                   # also the residual
    hidden = jnp.maximum(conv(x, w1_ref), 0.0)       # ConvT1 + ReLU
    out = conv(hidden, w2_ref) + x                   # ConvT2 + residual
    out_ref[...] = jnp.maximum(out, 0.0).astype(out_ref.dtype)


def _taps_from_convT_weight(w_t):
    """ConvTranspose2d weight (Cin, Cout, 3, 3) -> per-tap matrices
    (9, Cin, Cout) of the equivalent regular SAME conv (spatially flipped)."""
    w_eff = w_t[:, :, ::-1, ::-1]                    # (Ci, Co, 3, 3)
    return jnp.transpose(w_eff, (2, 3, 0, 1)).reshape(9, w_t.shape[0], w_t.shape[1])


def _block_diag_weights(taps, W):
    """(9, Ci, Co) -> (9*W*Ci, W*Co) block-diagonal weight matching the
    channels-in-lanes (H, W*C) im2col slab layout."""
    nine, Ci, Co = taps.shape
    eye = jnp.eye(W, dtype=taps.dtype)
    blk = jnp.einsum("wv,tcd->twcvd", eye, taps)     # (9, W, Ci, W, Co)
    return blk.reshape(nine * W * Ci, W * Co)


def basic_decode_block(x_nchw, w1_t, w2_t):
    """x_nchw: (B, Ci, H, W); w1_t: (Ci, Co, 3, 3); w2_t: (Co, Co, 3, 3)
    (PyTorch ConvTranspose2d layouts). Returns (B, Co, H, W)."""
    B, Ci, H, W = x_nchw.shape
    Co = w1_t.shape[1]
    assert Ci == Co, "stride=1 / downsample=None requires inplanes == planes"

    # NCHW -> (B, H, W*C): channels folded into the lane axis.
    x_flat = jnp.transpose(x_nchw, (0, 2, 3, 1)).reshape(B, H, W * Ci)
    x_flat = x_flat.astype(jnp.float32)

    w1_blk = _block_diag_weights(
        _taps_from_convT_weight(w1_t).astype(jnp.float32), W)
    w2_blk = _block_diag_weights(
        _taps_from_convT_weight(w2_t).astype(jnp.float32), W)

    kernel = functools.partial(_decode_block_kernel, C=Ci)

    flops = 2 * 2 * B * H * (9 * W * Ci) * (W * Co)          # two matmuls/image
    bytes_accessed = 4 * (x_flat.size + w1_blk.size + w2_blk.size
                          + B * H * W * Co)

    out_flat = pl.pallas_call(
        kernel,
        out_shape=jax.ShapeDtypeStruct((B, H, W * Co), jnp.float32),
        grid=(B,),
        in_specs=[
            pl.BlockSpec((None, H, W * Ci), lambda b: (b, 0, 0)),
            pl.BlockSpec((9 * W * Ci, W * Co), lambda b: (0, 0)),
            pl.BlockSpec((9 * W * Co, W * Co), lambda b: (0, 0)),
        ],
        out_specs=pl.BlockSpec((None, H, W * Co), lambda b: (b, 0, 0)),
        scratch_shapes=[
            pltpu.VMEM((H + 2, W * Ci + 2 * Ci), jnp.float32),   # halo staging
            pltpu.VMEM((H, 9 * W * Ci), jnp.float32),            # im2col slab
        ],
        compiler_params=pltpu.CompilerParams(
            dimension_semantics=("parallel",)),
        cost_estimate=pl.CostEstimate(
            flops=flops, transcendentals=0, bytes_accessed=bytes_accessed),
        input_output_aliases={0: 0},
    )(x_flat, w1_blk, w2_blk)

    out_nhwc = out_flat.reshape(B, H, W, Co)
    return jnp.transpose(out_nhwc, (0, 3, 1, 2))


def _reference(x_nchw, w1_t, w2_t):
    """Pure-JAX reference of the block (SAME conv with effective kernels)."""
    x = jnp.transpose(x_nchw, (0, 2, 3, 1)).astype(jnp.float32)

    def conv(inp, w_t):
        k = jnp.transpose(w_t[:, :, ::-1, ::-1], (2, 3, 0, 1))  # HWIO
        return lax.conv_general_dilated(
            inp, k, window_strides=(1, 1), padding="SAME",
            dimension_numbers=("NHWC", "HWIO", "NHWC"))

    h = jax.nn.relu(conv(x, w1_t))
    o = jax.nn.relu(conv(h, w2_t) + x)
    return jnp.transpose(o, (0, 3, 1, 2))


if __name__ == "__main__":
    B, C, H, W = 2, 4, 16, 16          # inplanes = planes = 4, stride = 1
    key = jax.random.PRNGKey(0)
    kx, k1, k2 = jax.random.split(key, 3)

    x = jax.random.normal(kx, (B, C, H, W), dtype=jnp.float32)
    # ConvTranspose2d weights: (in_channels, out_channels, kH, kW), no bias.
    w1 = 0.1 * jax.random.normal(k1, (C, C, 3, 3), dtype=jnp.float32)
    w2 = 0.1 * jax.random.normal(k2, (C, C, 3, 3), dtype=jnp.float32)

    decode = jax.jit(basic_decode_block)
    out = decode(x, w1, w2)
    jax.block_until_ready(out)

    ref = _reference(x, w1, w2)
    assert out.shape == (B, C, H, W)
    assert jnp.allclose(out, ref, atol=1e-4, rtol=1e-4), "mismatch vs reference"

    print("KERNEL_OK")
</pallas_src>

<mosaic_0001>
module attributes {stable_mosaic.version = 11 : i64} {
  func.func @_decode_block_kernel(%arg0: i32, %arg1: memref<1x16x64xf32, #tpu.memory_space<vmem>>, %arg2: memref<576x64xf32, #tpu.memory_space<vmem>>, %arg3: memref<576x64xf32, #tpu.memory_space<vmem>>, %arg4: memref<1x16x64xf32, #tpu.memory_space<vmem>>, %arg5: memref<18x72xf32, #tpu.memory_space<vmem>>, %arg6: memref<16x576xf32, #tpu.memory_space<vmem>>) attributes {dimension_semantics = [#tpu.dimension_semantics<parallel>], iteration_bounds = array<i64: 2>, scalar_prefetch = 0 : i64, scratch_operands = 2 : i64, tpu.core_type = #tpu.core_type<tc>, window_params = [{transform_indices = @transform_0, window_bounds = array<i64: 1, 16, 64>}, {pipeline_mode = #tpu.pipeline_mode<synchronous>, transform_indices = @transform_1, window_bounds = array<i64: 576, 64>}, {pipeline_mode = #tpu.pipeline_mode<synchronous>, transform_indices = @transform_2, window_bounds = array<i64: 576, 64>}, {transform_indices = @transform_3, window_bounds = array<i64: 1, 16, 64>}]} {
    %cst = arith.constant 0.000000e+00 : f32
    %0 = vector.broadcast %cst : f32 to vector<18x72xf32>
    %c0 = arith.constant 0 : index
    %c0_0 = arith.constant 0 : index
    %1 = vector.load %arg5[%c0, %c0_0] : memref<18x72xf32, #tpu.memory_space<vmem>>, vector<18x72xf32>
    tpu.vector_store %arg5[%c0, %c0_0], %0 {strides = array<i32>} : memref<18x72xf32, #tpu.memory_space<vmem>>, vector<18x72xf32>,
    %c0_1 = arith.constant 0 : index
    %c0_2 = arith.constant 0 : index
    %c0_3 = arith.constant 0 : index
    %2 = vector.load %arg1[%c0_1, %c0_2, %c0_3] : memref<1x16x64xf32, #tpu.memory_space<vmem>>, vector<1x16x64xf32>
    %3 = vector.shape_cast %2 : vector<1x16x64xf32> to vector<16x64xf32>
    %c1 = arith.constant 1 : index
    %c4 = arith.constant 4 : index
    %4 = vector.load %arg5[%c1, %c4] : memref<18x72xf32, #tpu.memory_space<vmem>>, vector<16x64xf32>
    tpu.vector_store %arg5[%c1, %c4], %3 {strides = array<i32>} : memref<18x72xf32, #tpu.memory_space<vmem>>, vector<16x64xf32>,
    %c0_4 = arith.constant 0 : index
    %c0_5 = arith.constant 0 : index
    %5 = vector.load %arg5[%c0_4, %c0_5] : memref<18x72xf32, #tpu.memory_space<vmem>>, vector<16x64xf32>
    %c0_6 = arith.constant 0 : index
    %c0_7 = arith.constant 0 : index
    %6 = vector.load %arg6[%c0_6, %c0_7] : memref<16x576xf32, #tpu.memory_space<vmem>>, vector<16x64xf32>
    tpu.vector_store %arg6[%c0_6, %c0_7], %5 {strides = array<i32>} : memref<16x576xf32, #tpu.memory_space<vmem>>, vector<16x64xf32>,
    %c0_8 = arith.constant 0 : index
    %c4_9 = arith.constant 4 : index
    %7 = vector.load %arg5[%c0_8, %c4_9] : memref<18x72xf32, #tpu.memory_space<vmem>>, vector<16x64xf32>
    %c0_10 = arith.constant 0 : index
    %c64 = arith.constant 64 : index
    %8 = vector.load %arg6[%c0_10, %c64] : memref<16x576xf32, #tpu.memory_space<vmem>>, vector<16x64xf32>
    tpu.vector_store %arg6[%c0_10, %c64], %7 {strides = array<i32>} : memref<16x576xf32, #tpu.memory_space<vmem>>, vector<16x64xf32>,
    %c0_11 = arith.constant 0 : index
    %c8 = arith.constant 8 : index
    %9 = vector.load %arg5[%c0_11, %c8] : memref<18x72xf32, #tpu.memory_space<vmem>>, vector<16x64xf32>
    %c0_12 = arith.constant 0 : index
    %c128 = arith.constant 128 : index
    %10 = vector.load %arg6[%c0_12, %c128] : memref<16x576xf32, #tpu.memory_space<vmem>>, vector<16x64xf32>
    tpu.vector_store %arg6[%c0_12, %c128], %9 {strides = array<i32>} : memref<16x576xf32, #tpu.memory_space<vmem>>, vector<16x64xf32>,
    %c1_13 = arith.constant 1 : index
    %c0_14 = arith.constant 0 : index
    %11 = vector.load %arg5[%c1_13, %c0_14] : memref<18x72xf32, #tpu.memory_space<vmem>>, vector<16x64xf32>
    %c0_15 = arith.constant 0 : index
    %c192 = arith.constant 192 : index
    %12 = vector.load %arg6[%c0_15, %c192] : memref<16x576xf32, #tpu.memory_space<vmem>>, vector<16x64xf32>
    tpu.vector_store %arg6[%c0_15, %c192], %11 {strides = array<i32>} : memref<16x576xf32, #tpu.memory_space<vmem>>, vector<16x64xf32>,
    %c1_16 = arith.constant 1 : index
    %c4_17 = arith.constant 4 : index
    %13 = vector.load %arg5[%c1_16, %c4_17] : memref<18x72xf32, #tpu.memory_space<vmem>>, vector<16x64xf32>
    %c0_18 = arith.constant 0 : index
    %c256 = arith.constant 256 : index
    %14 = vector.load %arg6[%c0_18, %c256] : memref<16x576xf32, #tpu.memory_space<vmem>>, vector<16x64xf32>
    tpu.vector_store %arg6[%c0_18, %c256], %13 {strides = array<i32>} : memref<16x576xf32, #tpu.memory_space<vmem>>, vector<16x64xf32>,
    %c1_19 = arith.constant 1 : index
    %c8_20 = arith.constant 8 : index
    %15 = vector.load %arg5[%c1_19, %c8_20] : memref<18x72xf32, #tpu.memory_space<vmem>>, vector<16x64xf32>
    %c0_21 = arith.constant 0 : index
    %c320 = arith.constant 320 : index
    %16 = vector.load %arg6[%c0_21, %c320] : memref<16x576xf32, #tpu.memory_space<vmem>>, vector<16x64xf32>
    tpu.vector_store %arg6[%c0_21, %c320], %15 {strides = array<i32>} : memref<16x576xf32, #tpu.memory_space<vmem>>, vector<16x64xf32>,
    %c2 = arith.constant 2 : index
    %c0_22 = arith.constant 0 : index
    %17 = vector.load %arg5[%c2, %c0_22] : memref<18x72xf32, #tpu.memory_space<vmem>>, vector<16x64xf32>
    %c0_23 = arith.constant 0 : index
    %c384 = arith.constant 384 : index
    %18 = vector.load %arg6[%c0_23, %c384] : memref<16x576xf32, #tpu.memory_space<vmem>>, vector<16x64xf32>
    tpu.vector_store %arg6[%c0_23, %c384], %17 {strides = array<i32>} : memref<16x576xf32, #tpu.memory_space<vmem>>, vector<16x64xf32>,
    %c2_24 = arith.constant 2 : index
    %c4_25 = arith.constant 4 : index
    %19 = vector.load %arg5[%c2_24, %c4_25] : memref<18x72xf32, #tpu.memory_space<vmem>>, vector<16x64xf32>
    %c0_26 = arith.constant 0 : index
    %c448 = arith.constant 448 : index
    %20 = vector.load %arg6[%c0_26, %c448] : memref<16x576xf32, #tpu.memory_space<vmem>>, vector<16x64xf32>
    tpu.vector_store %arg6[%c0_26, %c448], %19 {strides = array<i32>} : memref<16x576xf32, #tpu.memory_space<vmem>>, vector<16x64xf32>,
    %c2_27 = arith.constant 2 : index
    %c8_28 = arith.constant 8 : index
    %21 = vector.load %arg5[%c2_27, %c8_28] : memref<18x72xf32, #tpu.memory_space<vmem>>, vector<16x64xf32>
    %c0_29 = arith.constant 0 : index
    %c512 = arith.constant 512 : index
    %22 = vector.load %arg6[%c0_29, %c512] : memref<16x576xf32, #tpu.memory_space<vmem>>, vector<16x64xf32>
    tpu.vector_store %arg6[%c0_29, %c512], %21 {strides = array<i32>} : memref<16x576xf32, #tpu.memory_space<vmem>>, vector<16x64xf32>,
    %c0_30 = arith.constant 0 : index
    %c0_31 = arith.constant 0 : index
    %23 = vector.load %arg6[%c0_30, %c0_31] : memref<16x576xf32, #tpu.memory_space<vmem>>, vector<16x576xf32>
    %c0_32 = arith.constant 0 : index
    %c0_33 = arith.constant 0 : index
    %24 = vector.load %arg2[%c0_32, %c0_33] : memref<576x64xf32, #tpu.memory_space<vmem>>, vector<576x64xf32>
    %cst_34 = arith.constant dense<0.000000e+00> : vector<16x64xf32>
    %25 = tpu.matmul %23, %24, %cst_34 {dimension_numbers = #tpu.dot_dimension_numbers<[1], [0], [0], [1], [0, 0, 1, 1], [], []>} : vector<16x576xf32>, vector<576x64xf32>, vector<16x64xf32> -> vector<16x64xf32>
    %cst_35 = arith.constant 0.000000e+00 : f32
    %26 = vector.broadcast %cst_35 : f32 to vector<16x64xf32>
    %27 = arith.maximumf %25, %26 : vector<16x64xf32>
    %c1_36 = arith.constant 1 : index
    %c4_37 = arith.constant 4 : index
    %28 = vector.load %arg5[%c1_36, %c4_37] : memref<18x72xf32, #tpu.memory_space<vmem>>, vector<16x64xf32>
    tpu.vector_store %arg5[%c1_36, %c4_37], %27 {strides = array<i32>} : memref<18x72xf32, #tpu.memory_space<vmem>>, vector<16x64xf32>,
    %c0_38 = arith.constant 0 : index
    %c0_39 = arith.constant 0 : index
    %29 = vector.load %arg5[%c0_38, %c0_39] : memref<18x72xf32, #tpu.memory_space<vmem>>, vector<16x64xf32>
    %c0_40 = arith.constant 0 : index
    %c0_41 = arith.constant 0 : index
    %30 = vector.load %arg6[%c0_40, %c0_41] : memref<16x576xf32, #tpu.memory_space<vmem>>, vector<16x64xf32>
    tpu.vector_store %arg6[%c0_40, %c0_41], %29 {strides = array<i32>} : memref<16x576xf32, #tpu.memory_space<vmem>>, vector<16x64xf32>,
    %c0_42 = arith.constant 0 : index
    %c4_43 = arith.constant 4 : index
    %31 = vector.load %arg5[%c0_42, %c4_43] : memref<18x72xf32, #tpu.memory_space<vmem>>, vector<16x64xf32>
    %c0_44 = arith.constant 0 : index
    %c64_45 = arith.constant 64 : index
    %32 = vector.load %arg6[%c0_44, %c64_45] : memref<16x576xf32, #tpu.memory_space<vmem>>, vector<16x64xf32>
    tpu.vector_store %arg6[%c0_44, %c64_45], %31 {strides = array<i32>} : memref<16x576xf32, #tpu.memory_space<vmem>>, vector<16x64xf32>,
    %c0_46 = arith.constant 0 : index
    %c8_47 = arith.constant 8 : index
    %33 = vector.load %arg5[%c0_46, %c8_47] : memref<18x72xf32, #tpu.memory_space<vmem>>, vector<16x64xf32>
    %c0_48 = arith.constant 0 : index
    %c128_49 = arith.constant 128 : index
    %34 = vector.load %arg6[%c0_48, %c128_49] : memref<16x576xf32, #tpu.memory_space<vmem>>, vector<16x64xf32>
    tpu.vector_store %arg6[%c0_48, %c128_49], %33 {strides = array<i32>} : memref<16x576xf32, #tpu.memory_space<vmem>>, vector<16x64xf32>,
    %c1_50 = arith.constant 1 : index
    %c0_51 = arith.constant 0 : index
    %35 = vector.load %arg5[%c1_50, %c0_51] : memref<18x72xf32, #tpu.memory_space<vmem>>, vector<16x64xf32>
    %c0_52 = arith.constant 0 : index
    %c192_53 = arith.constant 192 : index
    %36 = vector.load %arg6[%c0_52, %c192_53] : memref<16x576xf32, #tpu.memory_space<vmem>>, vector<16x64xf32>
    tpu.vector_store %arg6[%c0_52, %c192_53], %35 {strides = array<i32>} : memref<16x576xf32, #tpu.memory_space<vmem>>, vector<16x64xf32>,
    %c1_54 = arith.constant 1 : index
    %c4_55 = arith.constant 4 : index
    %37 = vector.load %arg5[%c1_54, %c4_55] : memref<18x72xf32, #tpu.memory_space<vmem>>, vector<16x64xf32>
    %c0_56 = arith.constant 0 : index
    %c256_57 = arith.constant 256 : index
    %38 = vector.load %arg6[%c0_56, %c256_57] : memref<16x576xf32, #tpu.memory_space<vmem>>, vector<16x64xf32>
    tpu.vector_store %arg6[%c0_56, %c256_57], %37 {strides = array<i32>} : memref<16x576xf32, #tpu.memory_space<vmem>>, vector<16x64xf32>,
    %c1_58 = arith.constant 1 : index
    %c8_59 = arith.constant 8 : index
    %39 = vector.load %arg5[%c1_58, %c8_59] : memref<18x72xf32, #tpu.memory_space<vmem>>, vector<16x64xf32>
    %c0_60 = arith.constant 0 : index
    %c320_61 = arith.constant 320 : index
    %40 = vector.load %arg6[%c0_60, %c320_61] : memref<16x576xf32, #tpu.memory_space<vmem>>, vector<16x64xf32>
    tpu.vector_store %arg6[%c0_60, %c320_61], %39 {strides = array<i32>} : memref<16x576xf32, #tpu.memory_space<vmem>>, vector<16x64xf32>,
    %c2_62 = arith.constant 2 : index
    %c0_63 = arith.constant 0 : index
    %41 = vector.load %arg5[%c2_62, %c0_63] : memref<18x72xf32, #tpu.memory_space<vmem>>, vector<16x64xf32>
    %c0_64 = arith.constant 0 : index
    %c384_65 = arith.constant 384 : index
    %42 = vector.load %arg6[%c0_64, %c384_65] : memref<16x576xf32, #tpu.memory_space<vmem>>, vector<16x64xf32>
    tpu.vector_store %arg6[%c0_64, %c384_65], %41 {strides = array<i32>} : memref<16x576xf32, #tpu.memory_space<vmem>>, vector<16x64xf32>,
    %c2_66 = arith.constant 2 : index
    %c4_67 = arith.constant 4 : index
    %43 = vector.load %arg5[%c2_66, %c4_67] : memref<18x72xf32, #tpu.memory_space<vmem>>, vector<16x64xf32>
    %c0_68 = arith.constant 0 : index
    %c448_69 = arith.constant 448 : index
    %44 = vector.load %arg6[%c0_68, %c448_69] : memref<16x576xf32, #tpu.memory_space<vmem>>, vector<16x64xf32>
    tpu.vector_store %arg6[%c0_68, %c448_69], %43 {strides = array<i32>} : memref<16x576xf32, #tpu.memory_space<vmem>>, vector<16x64xf32>,
    %c2_70 = arith.constant 2 : index
    %c8_71 = arith.constant 8 : index
    %45 = vector.load %arg5[%c2_70, %c8_71] : memref<18x72xf32, #tpu.memory_space<vmem>>, vector<16x64xf32>
    %c0_72 = arith.constant 0 : index
    %c512_73 = arith.constant 512 : index
    %46 = vector.load %arg6[%c0_72, %c512_73] : memref<16x576xf32, #tpu.memory_space<vmem>>, vector<16x64xf32>
    tpu.vector_store %arg6[%c0_72, %c512_73], %45 {strides = array<i32>} : memref<16x576xf32, #tpu.memory_space<vmem>>, vector<16x64xf32>,
    %c0_74 = arith.constant 0 : index
    %c0_75 = arith.constant 0 : index
    %47 = vector.load %arg6[%c0_74, %c0_75] : memref<16x576xf32, #tpu.memory_space<vmem>>, vector<16x576xf32>
    %c0_76 = arith.constant 0 : index
    %c0_77 = arith.constant 0 : index
    %48 = vector.load %arg3[%c0_76, %c0_77] : memref<576x64xf32, #tpu.memory_space<vmem>>, vector<576x64xf32>
    %cst_78 = arith.constant dense<0.000000e+00> : vector<16x64xf32>
    %49 = tpu.matmul %47, %48, %cst_78 {dimension_numbers = #tpu.dot_dimension_numbers<[1], [0], [0], [1], [0, 0, 1, 1], [], []>} : vector<16x576xf32>, vector<576x64xf32>, vector<16x64xf32> -> vector<16x64xf32>
    %50 = arith.addf %49, %3 : vector<16x64xf32>
    %cst_79 = arith.constant 0.000000e+00 : f32
    %51 = vector.broadcast %cst_79 : f32 to vector<16x64xf32>
    %52 = arith.maximumf %50, %51 : vector<16x64xf32>
    %c0_80 = arith.constant 0 : index
    %c0_81 = arith.constant 0 : index
    %c0_82 = arith.constant 0 : index
    %53 = vector.load %arg4[%c0_80, %c0_81, %c0_82] : memref<1x16x64xf32, #tpu.memory_space<vmem>>, vector<1x16x64xf32>
    %54 = vector.shape_cast %53 : vector<1x16x64xf32> to vector<16x64xf32>
    %55 = vector.shape_cast %52 : vector<16x64xf32> to vector<1x16x64xf32>
    tpu.vector_store %arg4[%c0_80, %c0_81, %c0_82], %55 {strides = array<i32>} : memref<1x16x64xf32, #tpu.memory_space<vmem>>, vector<1x16x64xf32>,
    return
  }
  func.func @transform_0(%arg0: i32) -> (i32, i32, i32) {
    %c0_i32 = arith.constant 0 : i32
    %c0_i32_0 = arith.constant 0 : i32
    %c0_i32_1 = arith.constant 0 : i32
    return %arg0, %c0_i32, %c0_i32_0 : i32, i32, i32
  }
  func.func @transform_1(%arg0: i32) -> (i32, i32) {
    %c0_i32 = arith.constant 0 : i32
    %c0_i32_0 = arith.constant 0 : i32
    %c0_i32_1 = arith.constant 0 : i32
    return %c0_i32, %c0_i32_0 : i32, i32
  }
  func.func @transform_2(%arg0: i32) -> (i32, i32) {
    %c0_i32 = arith.constant 0 : i32
    %c0_i32_0 = arith.constant 0 : i32
    %c0_i32_1 = arith.constant 0 : i32
    return %c0_i32, %c0_i32_0 : i32, i32
  }
  func.func @transform_3(%arg0: i32) -> (i32, i32, i32) {
    %c0_i32 = arith.constant 0 : i32
    %c0_i32_0 = arith.constant 0 : i32
    %c0_i32_1 = arith.constant 0 : i32
    return %arg0, %c0_i32, %c0_i32_0 : i32, i32, i32
  }
}

</mosaic_0001>

<llo_original>
// kernel: basic_decode_block.1
$region0: #{basic_decode_block.1}
  #allocation0 [shape = 'u32[]', space=smem, size = 0x4, offset = 0x4, fixed_abs, tag = 'smem constant byte address 0x4 - core index']
  #allocation1 [shape = 'u32[144,128]{1,0:T(1,128)}', space=vmem, size = 0x12000, scoped, tag = 'internal scratch']
  #allocation2 [shape = 'f32[18,72]{1,0:T(8,128)}', space=vmem, size = 0x3000, scoped, tag = 'scratch operand']
  #allocation3 [shape = 'f32[16,576]{1,0:T(8,128)}', space=vmem, size = 0xa000, scoped, tag = 'scratch operand']
  %s0 = inlined_call_operand.vmem [shape: f32[2,16,64], index: 0, kind: input, shape index: {}, may-alias: {0,3}]
  %s1 = inlined_call_operand.vmem [shape: f32[576,64], index: 1, kind: input, shape index: {}]
  %s2 = inlined_call_operand.vmem [shape: f32[576,64], index: 2, kind: input, shape index: {}]
  %s3 = inlined_call_operand.vmem [shape: f32[2,16,64], index: 3, kind: output, shape index: {}, may-alias: {0,3}]
  %s4 = sld [smem:[#allocation0]]
  $region45: #{basic_decode_block.1} parent=0
    _
  %s6 = ssub.s32 1, %s4
  %s7 = scalar_select 0, %s6, %s4
  loop: start=0, step=1, limit=4
  $region2: #{basic_decode_block.1} parent=0 // loop_pre_header
    _
  $region3: #{basic_decode_block.1} parent=0 // loop_header
    %s9 = sphi 0, %s13
    %p10 = scmp.ge.s32.totalorder %s9, 4
    %s19 = sphi 0, %s21
    %s22 = sphi 0, %s19
    %s23 = sphi 0, %s22
    %s39 = sphi 0, %s23
    %s43 = sphi 0, %s43
    %s45 = sphi 0, %s43
    %s46 = sphi 0, %s45
    %s60 = sphi 0, %s46
    %s64 = sphi 0, %s64
    %s66 = sphi 0, %s64
    %s67 = sphi 0, %s66
    %s81 = sphi 0, %s67
    %s87 = sphi 0, %s89
    %s90 = sphi 0, %s87
    %s91 = sphi 0, %s90
    %s107 = sphi 0, %s91
  $region4: #{basic_decode_block.1} parent=0 // loop_header_branch
    %12 = sbr.rel (%p10) target = $region8
  $region5: #{basic_decode_block.1} parent=0 // loop_body
    %s14 = ssub.s32 %s9, 1
    %s15 = ssub.s32 %s9, 2
    %s16 = sadd.s32 %s9, 1
    %s17 = ssub.s32 %s9, %s16
    %p18 = scmp.eq.s32.totalorder %s17, 0
    %s20 = sadd.s32 %s19, 1
    %s21 = scalar_select %p18, %s19, %s20
    %p24 = pneg %p18
    %p25 = scmp.eq.s32.totalorder %s9, 1
    %p26 = por %p24, %p25
    %p27 = scmp.ne.s32.totalorder %s19, %s22
    %p28 = scmp.eq.s32.totalorder %s9, 0
    %p29 = por %p27, %p28
    %p30 = scmp.ne.s32.totalorder %s19, %s22
    %p31 = scmp.eq.s32.totalorder %s14, 1
    %p32 = por %p30, %p31
    %p33 = scmp.ne.s32.totalorder %s22, %s23
    %p34 = scmp.eq.s32.totalorder %s14, 0
    %p35 = por %p33, %p34
    %p36 = scmp.ne.s32.totalorder %s22, %s23
    %p37 = scmp.eq.s32.totalorder %s15, 1
    %p38 = por %p36, %p37
    %p40 = scmp.ne.s32.totalorder %s23, %s39
    %p41 = scmp.eq.s32.totalorder %s15, 0
    %p42 = por %p40, %p41
    %s44 = sadd.s32 %s43, 1
    %p47 = scmp.eq.s32.totalorder %s9, 1
    %p48 = scmp.ne.s32.totalorder %s43, %s45
    %p49 = scmp.eq.s32.totalorder %s9, 0
    %p50 = por %p48, %p49
    %p51 = scmp.ne.s32.totalorder %s43, %s45
    %p52 = scmp.eq.s32.totalorder %s14, 1
    %p53 = por %p51, %p52
    %p54 = scmp.ne.s32.totalorder %s45, %s46
    %p55 = scmp.eq.s32.totalorder %s14, 0
    %p56 = por %p54, %p55
    %p57 = scmp.ne.s32.totalorder %s45, %s46
    %p58 = scmp.eq.s32.totalorder %s15, 1
    %p59 = por %p57, %p58
    %p61 = scmp.ne.s32.totalorder %s46, %s60
    %p62 = scmp.eq.s32.totalorder %s15, 0
    %p63 = por %p61, %p62
    %s65 = sadd.s32 %s64, 1
    %p68 = scmp.eq.s32.totalorder %s9, 1
    %p69 = scmp.ne.s32.totalorder %s64, %s66
    %p70 = scmp.eq.s32.totalorder %s9, 0
    %p71 = por %p69, %p70
    %p72 = scmp.ne.s32.totalorder %s64, %s66
    %p73 = scmp.eq.s32.totalorder %s14, 1
    %p74 = por %p72, %p73
    %p75 = scmp.ne.s32.totalorder %s66, %s67
    %p76 = scmp.eq.s32.totalorder %s14, 0
    %p77 = por %p75, %p76
    %p78 = scmp.ne.s32.totalorder %s66, %s67
    %p79 = scmp.eq.s32.totalorder %s15, 1
    %p80 = por %p78, %p79
    %p82 = scmp.ne.s32.totalorder %s67, %s81
    %p83 = scmp.eq.s32.totalorder %s15, 0
    %p84 = por %p82, %p83
    %s85 = ssub.s32 %s9, %s16
    %p86 = scmp.eq.s32.totalorder %s85, 0
    %s88 = sadd.s32 %s87, 1
    %s89 = scalar_select %p86, %s87, %s88
    %p92 = pneg %p86
    %p93 = scmp.eq.s32.totalorder %s9, 1
    %p94 = por %p92, %p93
    %p95 = scmp.ne.s32.totalorder %s87, %s90
    %p96 = scmp.eq.s32.totalorder %s9, 0
    %p97 = por %p95, %p96
    %p98 = scmp.ne.s32.totalorder %s87, %s90
    %p99 = scmp.eq.s32.totalorder %s14, 1
    %p100 = por %p98, %p99
    %p101 = scmp.ne.s32.totalorder %s90, %s91
    %p102 = scmp.eq.s32.totalorder %s14, 0
    %p103 = por %p101, %p102
    %p104 = scmp.ne.s32.totalorder %s90, %s91
    %p105 = scmp.eq.s32.totalorder %s15, 1
    %p106 = por %p104, %p105
    %p108 = scmp.ne.s32.totalorder %s91, %s107
    %p109 = scmp.eq.s32.totalorder %s15, 0
    %p110 = por %p108, %p109
    %p111 = scmp.le.s32.totalorder 1, %s9
    %p112 = scmp.lt.s32.totalorder %s9, 3
    %p113 = pnand %p111, %p112
    %p114 = pneg %p113
    // Predicated region
    $region9: #{basic_decode_block.1} parent=5 // pred_check
      _
    $region10: #{basic_decode_block.1} parent=5 // pred_check_branch
      %116 = sbr.rel (%p113) target = $region12
    $region11: #{basic_decode_block.1} parent=5 // pred_region
      %s117 = ssub.s32 %s9, 1
      // Predicated region
      $region13: #{basic_decode_block.1} parent=11 // pred_check
        %p118 = pneg %p56
      $region14: #{basic_decode_block.1} parent=11 // pred_check_branch
        %120 = sbr.rel (%p118) target = $region16
      $region15: #{basic_decode_block.1} parent=11 // pred_region
        _
      $region16: #{basic_decode_block.1} parent=11 // pred_fallthru
        _
      // Predicated region
      $region17: #{basic_decode_block.1} parent=11 // pred_check
        %p121 = pneg %p77
      $region18: #{basic_decode_block.1} parent=11 // pred_check_branch
        %123 = sbr.rel (%p121) target = $region20
      $region19: #{basic_decode_block.1} parent=11 // pred_region
        _
      $region20: #{basic_decode_block.1} parent=11 // pred_fallthru
        _
    $region12: #{basic_decode_block.1} parent=5 // pred_fallthru
      _
    %p124 = scmp.lt.s32.totalorder %s9, 2
    // Predicated region
    $region21: #{basic_decode_block.1} parent=5 // pred_check
      %p125 = pneg %p124
    $region22: #{basic_decode_block.1} parent=5 // pred_check_branch
      %127 = sbr.rel (%p125) target = $region24
    $region23: #{basic_decode_block.1} parent=5 // pred_region
      // Predicated region
      $region25: #{basic_decode_block.1} parent=23 // pred_check
        %p128 = pneg %p29
      $region26: #{basic_decode_block.1} parent=23 // pred_check_branch
        %130 = sbr.rel (%p128) target = $region28
      $region27: #{basic_decode_block.1} parent=23 // pred_region
        %p131 = scmp.lt.s32.totalorder %s9, 1
        %s132 = scalar_select %p131, %s9, 1
        %s133 = smul.addr %s132, 2
        %s134 = smul.addr %s133, 8
        %s135 = scalar_lea.vmem %s0, %s134
      $region28: #{basic_decode_block.1} parent=23 // pred_fallthru
        _
    $region24: #{basic_decode_block.1} parent=5 // pred_fallthru
      _
    %p136 = scmp.le.s32.totalorder 1, %s9
    %p137 = scmp.lt.s32.totalorder %s9, 3
    %p138 = pnand %p136, %p137
    %p139 = pneg %p138
    // Predicated region
    $region29: #{basic_decode_block.1} parent=5 // pred_check
      _
    $region30: #{basic_decode_block.1} parent=5 // pred_check_branch
      %141 = sbr.rel (%p138) target = $region32
    $region31: #{basic_decode_block.1} parent=5 // pred_region
      %s142 = ssub.s32 %s9, 1
      %p143 = scmp.lt.s32.totalorder %s14, 1
      %s144 = scalar_select %p143, %s14, 1
      %s145 = smul.addr %s144, 2
      %s146 = smul.addr %s145, 8
      %s147 = scalar_lea.vmem %s0, %s146
      %p148 = pneg %p35
      %p149 = pneg %p32
      %p150 = pneg %p56
      %p151 = pneg %p53
      %p152 = pneg %p77
      %p153 = pneg %p74
      %p154 = pneg %p103
      %p155 = pneg %p100
      %p156 = scmp.lt.s32.totalorder %s14, 1
      %s157 = scalar_select %p156, %s14, 1
      %s158 = smul.addr %s157, 2
      %s159 = smul.addr %s158, 8
      %s160 = scalar_lea.vmem %s3, %s159
      %p161 = scmp.lt.s32.totalorder %s14, 1
      %s162 = scalar_select %p161, %s14, 1
      %s163 = smul.addr %s162, 2
      %s164 = smul.addr %s163, 8
      %s165 = scalar_lea.vmem %s0, %s164
      %p166 = scmp.lt.s32.totalorder %s14, 1
      %s167 = scalar_select %p166, %s14, 1
      %s168 = smul.addr %s167, 2
      %s169 = smul.addr %s168, 8
      %s170 = scalar_lea.vmem %s3, %s169
      %vm171 = vcmask 588800
      %172 = vst.msk [vmem:[#allocation2] sm:$0xff] %vm171, 0.0
      %173 = vst.msk [vmem:[#allocation2 + $0x8] sm:$0xff] %vm171, 0.0
      %vm174 = vcmask 582656
      %175 = vst.msk [vmem:[#allocation2 + $0x10] sm:$0x3] %vm174, 0.0
      %v176 = vld [vmem:[%s165] sm:$0xff]
      %v177 = vld [vmem:[%s165 + $0x8] sm:$0xff]
      %180 = vrot.lane.b32.xlu0 %v176, 4
      %v181 = vpop.permute.xlu0 %180
      %182 = vrot.lane.b32.xlu0 %v177, 4
      %v183 = vpop.permute.xlu0 %182
      %vm186 = vcmask 556064
      %187 = vst.msk [vmem:[#allocation2 + $0x1] sm:$0xff] %vm186, %v181
      %188 = vst.msk [vmem:[#allocation2 + $0x9] sm:$0xff] %vm186, %v183
      %v189 = vld [vmem:[#allocation2] sm:$0xff]
      %v190 = vld [vmem:[#allocation2 + $0x8] sm:$0xff]
      %vm191 = vcmask 523264
      %192 = vst.msk [vmem:[#allocation3] sm:$0xff] %vm191, %v189
      %193 = vst.msk [vmem:[#allocation3 + $0x28] sm:$0xff] %vm191, %v190
      %v194 = vld [vmem:[#allocation2] sm:$0xff]
      %v195 = vld [vmem:[#allocation2 + $0x8] sm:$0xff]
      %198 = vrot.lane.b32.xlu0 %v194, 60
      %v199 = vpop.permute.xlu0 %198
      %200 = vrot.lane.b32.xlu0 %v195, 60
      %v201 = vpop.permute.xlu0 %200
      %vm204 = vcmask 1048064
      %205 = vst.msk [vmem:[#allocation3] sm:$0xff] %vm204, %v199
      %206 = vst.msk [vmem:[#allocation3 + $0x28] sm:$0xff] %vm204, %v201
      %v207 = vld [vmem:[#allocation2] sm:$0xff]
      %v208 = vld [vmem:[#allocation2 + $0x8] sm:$0xff]
      %211 = vrot.lane.b32.xlu0 %v207, 120
      %v212 = vpop.permute.xlu0 %211
      %213 = vrot.lane.b32.xlu0 %v208, 120
      %v214 = vpop.permute.xlu0 %213
      %217 = vst.msk [vmem:[#allocation3 + $0x8] sm:$0xff] %vm191, %v212
      %218 = vst.msk [vmem:[#allocation3 + $0x30] sm:$0xff] %vm191, %v214
      %v219 = vld [vmem:[#allocation2 + $0x1] sm:$0xff]
      %v220 = vld [vmem:[#allocation2 + $0x9] sm:$0xff]
      %223 = vrot.lane.b32.xlu0 %v219, 64
      %v224 = vpop.permute.xlu0 %223
      %225 = vrot.lane.b32.xlu0 %v220, 64
      %v226 = vpop.permute.xlu0 %225
      %229 = vst.msk [vmem:[#allocation3 + $0x8] sm:$0xff] %vm204, %v224
      %230 = vst.msk [vmem:[#allocation3 + $0x30] sm:$0xff] %vm204, %v226
      %v231 = vld [vmem:[#allocation2 + $0x1] sm:$0xff]
      %v232 = vld [vmem:[#allocation2 + $0x9] sm:$0xff]
      %235 = vrot.lane.b32.xlu0 %v231, 124
      %v236 = vpop.permute.xlu0 %235
      %237 = vrot.lane.b32.xlu0 %v232, 124
      %v238 = vpop.permute.xlu0 %237
      %241 = vst.msk [vmem:[#allocation3 + $0x10] sm:$0xff] %vm191, %v236
      %242 = vst.msk [vmem:[#allocation3 + $0x38] sm:$0xff] %vm191, %v238
      %v243 = vld [vmem:[#allocation2 + $0x1] sm:$0xff]
      %v244 = vld [vmem:[#allocation2 + $0x9] sm:$0xff]
      %247 = vrot.lane.b32.xlu0 %v243, 56
      %v248 = vpop.permute.xlu0 %247
      %249 = vrot.lane.b32.xlu0 %v244, 56
      %v250 = vpop.permute.xlu0 %249
      %253 = vst.msk [vmem:[#allocation3 + $0x10] sm:$0xff] %vm204, %v248
      %254 = vst.msk [vmem:[#allocation3 + $0x38] sm:$0xff] %vm204, %v250
      %v255 = vld [vmem:[#allocation2 + $0x2] sm:$0xff]
      %v256 = vld [vmem:[#allocation2 + $0xa] sm:$0xff]
      %257 = vst.msk [vmem:[#allocation3 + $0x18] sm:$0xff] %vm191, %v255
      %258 = vst.msk [vmem:[#allocation3 + $0x40] sm:$0xff] %vm191, %v256
      %v259 = vld [vmem:[#allocation2 + $0x2] sm:$0xff]
      %v260 = vld [vmem:[#allocation2 + $0xa] sm:$0xff]
      %263 = vrot.lane.b32.xlu0 %v259, 60
      %v264 = vpop.permute.xlu0 %263
      %265 = vrot.lane.b32.xlu0 %v260, 60
      %v266 = vpop.permute.xlu0 %265
      %269 = vst.msk [vmem:[#allocation3 + $0x18] sm:$0xff] %vm204, %v264
      %270 = vst.msk [vmem:[#allocation3 + $0x40] sm:$0xff] %vm204, %v266
      %v271 = vld [vmem:[#allocation2 + $0x2] sm:$0xff]
      %v272 = vld [vmem:[#allocation2 + $0xa] sm:$0xff]
      %275 = vrot.lane.b32.xlu0 %v271, 120
      %v276 = vpop.permute.xlu0 %275
      %277 = vrot.lane.b32.xlu0 %v272, 120
      %v278 = vpop.permute.xlu0 %277
      %281 = vst.msk [vmem:[#allocation3 + $0x20] sm:$0xff] %vm191, %v276
      %282 = vst.msk [vmem:[#allocation3 + $0x48] sm:$0xff] %vm191, %v278
      %v283 = vld [vmem:[#allocation3] sm:$0xff]
      %v284 = vld [vmem:[#allocation3 + $0x8] sm:$0xff]
      %v285 = vld [vmem:[#allocation3 + $0x10] sm:$0xff]
      %v286 = vld [vmem:[#allocation3 + $0x18] sm:$0xff]
      %v287 = vld [vmem:[#allocation3 + $0x20] sm:$0xff]
      %v288 = vld [vmem:[#allocation3 + $0x28] sm:$0xff]
      %v289 = vld [vmem:[#allocation3 + $0x30] sm:$0xff]
      %v290 = vld [vmem:[#allocation3 + $0x38] sm:$0xff]
      %v291 = vld [vmem:[#allocation3 + $0x40] sm:$0xff]
      %v292 = vld [vmem:[#allocation3 + $0x48] sm:$0xff]
      %v293 = vld [vmem:[%s1] sm:$0xff]
      %v294 = vld [vmem:[%s1 + $0x8] sm:$0xff]
      %v295 = vld [vmem:[%s1 + $0x10] sm:$0xff]
      %v296 = vld [vmem:[%s1 + $0x18] sm:$0xff]
      %v297 = vld [vmem:[%s1 + $0x20] sm:$0xff]
      %v298 = vld [vmem:[%s1 + $0x28] sm:$0xff]
      %v299 = vld [vmem:[%s1 + $0x30] sm:$0xff]
      %v300 = vld [vmem:[%s1 + $0x38] sm:$0xff]
      %v301 = vld [vmem:[%s1 + $0x40] sm:$0xff]
      %v302 = vld [vmem:[%s1 + $0x48] sm:$0xff]
      %v303 = vld [vmem:[%s1 + $0x50] sm:$0xff]
      %v304 = vld [vmem:[%s1 + $0x58] sm:$0xff]
      %v305 = vld [vmem:[%s1 + $0x60] sm:$0xff]
      %v306 = vld [vmem:[%s1 + $0x68] sm:$0xff]
      %v307 = vld [vmem:[%s1 + $0x70] sm:$0xff]
      %v308 = vld [vmem:[%s1 + $0x78] sm:$0xff]
      %v309 = vld [vmem:[%s1 + $0x80] sm:$0xff]
      %v310 = vld [vmem:[%s1 + $0x88] sm:$0xff]
      %v311 = vld [vmem:[%s1 + $0x90] sm:$0xff]
      %v312 = vld [vmem:[%s1 + $0x98] sm:$0xff]
      %v313 = vld [vmem:[%s1 + $0xa0] sm:$0xff]
      %v314 = vld [vmem:[%s1 + $0xa8] sm:$0xff]
      %v315 = vld [vmem:[%s1 + $0xb0] sm:$0xff]
      %v316 = vld [vmem:[%s1 + $0xb8] sm:$0xff]
      %v317 = vld [vmem:[%s1 + $0xc0] sm:$0xff]
      %v318 = vld [vmem:[%s1 + $0xc8] sm:$0xff]
      %v319 = vld [vmem:[%s1 + $0xd0] sm:$0xff]
      %v320 = vld [vmem:[%s1 + $0xd8] sm:$0xff]
      %v321 = vld [vmem:[%s1 + $0xe0] sm:$0xff]
      %v322 = vld [vmem:[%s1 + $0xe8] sm:$0xff]
      %v323 = vld [vmem:[%s1 + $0xf0] sm:$0xff]
      %v324 = vld [vmem:[%s1 + $0xf8] sm:$0xff]
      %v325 = vld [vmem:[%s1 + $0x100] sm:$0xff]
      %v326 = vld [vmem:[%s1 + $0x108] sm:$0xff]
      %v327 = vld [vmem:[%s1 + $0x110] sm:$0xff]
      %v328 = vld [vmem:[%s1 + $0x118] sm:$0xff]
      %v329 = vld [vmem:[%s1 + $0x120] sm:$0xff]
      %v330 = vld [vmem:[%s1 + $0x128] sm:$0xff]
      %v331 = vld [vmem:[%s1 + $0x130] sm:$0xff]
      %v332 = vld [vmem:[%s1 + $0x138] sm:$0xff]
      %v333 = vld [vmem:[%s1 + $0x140] sm:$0xff]
      %v334 = vld [vmem:[%s1 + $0x148] sm:$0xff]
      %v335 = vld [vmem:[%s1 + $0x150] sm:$0xff]
      %v336 = vld [vmem:[%s1 + $0x158] sm:$0xff]
      %v337 = vld [vmem:[%s1 + $0x160] sm:$0xff]
      %v338 = vld [vmem:[%s1 + $0x168] sm:$0xff]
      %v339 = vld [vmem:[%s1 + $0x170] sm:$0xff]
      %v340 = vld [vmem:[%s1 + $0x178] sm:$0xff]
      %v341 = vld [vmem:[%s1 + $0x180] sm:$0xff]
      %v342 = vld [vmem:[%s1 + $0x188] sm:$0xff]
      %v343 = vld [vmem:[%s1 + $0x190] sm:$0xff]
      %v344 = vld [vmem:[%s1 + $0x198] sm:$0xff]
      %v345 = vld [vmem:[%s1 + $0x1a0] sm:$0xff]
      %v346 = vld [vmem:[%s1 + $0x1a8] sm:$0xff]
      %v347 = vld [vmem:[%s1 + $0x1b0] sm:$0xff]
      %v348 = vld [vmem:[%s1 + $0x1b8] sm:$0xff]
      %v349 = vld [vmem:[%s1 + $0x1c0] sm:$0xff]
      %v350 = vld [vmem:[%s1 + $0x1c8] sm:$0xff]
      %v351 = vld [vmem:[%s1 + $0x1d0] sm:$0xff]
      %v352 = vld [vmem:[%s1 + $0x1d8] sm:$0xff]
      %v353 = vld [vmem:[%s1 + $0x1e0] sm:$0xff]
      %v354 = vld [vmem:[%s1 + $0x1e8] sm:$0xff]
      %v355 = vld [vmem:[%s1 + $0x1f0] sm:$0xff]
      %v356 = vld [vmem:[%s1 + $0x1f8] sm:$0xff]
      %v357 = vld [vmem:[%s1 + $0x200] sm:$0xff]
      %v358 = vld [vmem:[%s1 + $0x208] sm:$0xff]
      %v359 = vld [vmem:[%s1 + $0x210] sm:$0xff]
      %v360 = vld [vmem:[%s1 + $0x218] sm:$0xff]
      %v361 = vld [vmem:[%s1 + $0x220] sm:$0xff]
      %v362 = vld [vmem:[%s1 + $0x228] sm:$0xff]
      %v363 = vld [vmem:[%s1 + $0x230] sm:$0xff]
      %v364 = vld [vmem:[%s1 + $0x238] sm:$0xff]
      %v366 = vsel %vm191, %v287, 0
      %v369 = vsel %vm191, %v292, 0
      %371 = vmatprep.subr.mxu0 0.0
      %372 = vmatpush1.msra.mxu0 %v293
      %373 = vmatprep.subr.mxu0 0.0
      %374 = vmatpush1.msra.mxu0 %v294
      %375 = vmatprep.subr.mxu0 0.0
      %376 = vmatpush1.msra.mxu0 %v295
      %377 = vmatprep.subr.mxu0 0.0
      %378 = vmatpush1.msra.mxu0 %v296
      %379 = vmatprep.subr.mxu0 0.0
      %380 = vmatpush1.msra.mxu0 %v297
      %381 = vmatprep.subr.mxu0 0.0
      %382 = vmatpush1.msra.mxu0 %v298
      %383 = vmatprep.subr.mxu0 0.0
      %384 = vmatpush1.msra.mxu0 %v299
      %385 = vmatprep.subr.mxu0 0.0
      %386 = vmatpush1.msra.mxu0 %v300
      %387 = vmatprep.subr.mxu0 0.0
      %388 = vmatpush1.msra.mxu0 %v301
      %389 = vmatprep.subr.mxu0 0.0
      %390 = vmatpush1.msra.mxu0 %v302
      %391 = vmatprep.subr.mxu0 0.0
      %392 = vmatpush1.msra.mxu0 %v303
      %393 = vmatprep.subr.mxu0 0.0
      %394 = vmatpush1.msra.mxu0 %v304
      %395 = vmatprep.subr.mxu0 0.0
      %396 = vmatpush1.msra.mxu0 %v305
      %397 = vmatprep.subr.mxu0 0.0
      %398 = vmatpush1.msra.mxu0 %v306
      %399 = vmatprep.subr.mxu0 0.0
      %400 = vmatpush1.msra.mxu0 %v307
      %401 = vmatprep.subr.mxu0 0.0
      %402 = vmatpush1.msra.mxu0 %v308
      %403 = vmatprep.subr.mxu0 0.0
      %404 = vmatpush1.msra.mxu0 %v309
      %405 = vmatprep.subr.mxu0 0.0
      %406 = vmatpush1.msra.mxu0 %v310
      %407 = vmatprep.subr.mxu0 0.0
      %408 = vmatpush1.msra.mxu0 %v311
      %409 = vmatprep.subr.mxu0 0.0
      %410 = vmatpush1.msra.mxu0 %v312
      %411 = vmatprep.subr.mxu0 0.0
      %412 = vmatpush1.msra.mxu0 %v313
      %413 = vmatprep.subr.mxu0 0.0
      %414 = vmatpush1.msra.mxu0 %v314
      %415 = vmatprep.subr.mxu0 0.0
      %416 = vmatpush1.msra.mxu0 %v315
      %417 = vmatprep.subr.mxu0 0.0
      %418 = vmatpush1.msra.mxu0 %v316
      %419 = vmatprep.subr.mxu0 0.0
      %420 = vmatpush1.msra.mxu0 %v317
      %421 = vmatprep.subr.mxu0 0.0
      %422 = vmatpush1.msra.mxu0 %v318
      %423 = vmatprep.subr.mxu0 0.0
      %424 = vmatpush1.msra.mxu0 %v319
      %425 = vmatprep.subr.mxu0 0.0
      %426 = vmatpush1.msra.mxu0 %v320
      %427 = vmatprep.subr.mxu0 0.0
      %428 = vmatpush1.msra.mxu0 %v321
      %429 = vmatprep.subr.mxu0 0.0
      %430 = vmatpush1.msra.mxu0 %v322
      %431 = vmatprep.subr.mxu0 0.0
      %432 = vmatpush1.msra.mxu0 %v323
      %433 = vmatprep.subr.mxu0 0.0
      %434 = vmatpush1.msra.mxu0 %v324
      %435 = vmatprep.mubr.f32.mxu0 %v284
      %436 = vmatmul.mubr.f32.gmra.mrb[0].mxu0 %v283
      %v437 = vpop.f32.mrb[0].mxu0
      %v438 = vadd.f32 0.0, %v437
      %v439 = vpop.f32.mrb[0].mxu0
      %440 = vmatprep.mubr.f32.mxu0 %v289
      %441 = vmatmul.mubr.f32.gmra.mrb[0].mxu0 %v288
      %v442 = vpop.f32.mrb[0].mxu0
      %v443 = vadd.f32 0.0, %v442
      %v444 = vpop.f32.mrb[0].mxu0
      %445 = vdwg.mxu0
      %446 = vmatprep.subr.mxu0 0.0
      %447 = vmatpush1.msra.mxu0 %v325
      %448 = vmatprep.subr.mxu0 0.0
      %449 = vmatpush1.msra.mxu0 %v326
      %450 = vmatprep.subr.mxu0 0.0
      %451 = vmatpush1.msra.mxu0 %v327
      %452 = vmatprep.subr.mxu0 0.0
      %453 = vmatpush1.msra.mxu0 %v328
      %454 = vmatprep.subr.mxu0 0.0
      %455 = vmatpush1.msra.mxu0 %v329
      %456 = vmatprep.subr.mxu0 0.0
      %457 = vmatpush1.msra.mxu0 %v330
      %458 = vmatprep.subr.mxu0 0.0
      %459 = vmatpush1.msra.mxu0 %v331
      %460 = vmatprep.subr.mxu0 0.0
      %461 = vmatpush1.msra.mxu0 %v332
      %462 = vmatprep.subr.mxu0 0.0
      %463 = vmatpush1.msra.mxu0 %v333
      %464 = vmatprep.subr.mxu0 0.0
      %465 = vmatpush1.msra.mxu0 %v334
      %466 = vmatprep.subr.mxu0 0.0
      %467 = vmatpush1.msra.mxu0 %v335
      %468 = vmatprep.subr.mxu0 0.0
      %469 = vmatpush1.msra.mxu0 %v336
      %470 = vmatprep.subr.mxu0 0.0
      %471 = vmatpush1.msra.mxu0 %v337
      %472 = vmatprep.subr.mxu0 0.0
      %473 = vmatpush1.msra.mxu0 %v338
      %474 = vmatprep.subr.mxu0 0.0
      %475 = vmatpush1.msra.mxu0 %v339
      %476 = vmatprep.subr.mxu0 0.0
      %477 = vmatpush1.msra.mxu0 %v340
      %478 = vmatprep.subr.mxu0 0.0
      %479 = vmatpush1.msra.mxu0 %v341
      %480 = vmatprep.subr.mxu0 0.0
      %481 = vmatpush1.msra.mxu0 %v342
      %482 = vmatprep.subr.mxu0 0.0
      %483 = vmatpush1.msra.mxu0 %v343
      %484 = vmatprep.subr.mxu0 0.0
      %485 = vmatpush1.msra.mxu0 %v344
      %486 = vmatprep.subr.mxu0 0.0
      %487 = vmatpush1.msra.mxu0 %v345
      %488 = vmatprep.subr.mxu0 0.0
      %489 = vmatpush1.msra.mxu0 %v346
      %490 = vmatprep.subr.mxu0 0.0
      %491 = vmatpush1.msra.mxu0 %v347
      %492 = vmatprep.subr.mxu0 0.0
      %493 = vmatpush1.msra.mxu0 %v348
      %494 = vmatprep.subr.mxu0 0.0
      %495 = vmatpush1.msra.mxu0 %v349
      %496 = vmatprep.subr.mxu0 0.0
      %497 = vmatpush1.msra.mxu0 %v350
      %498 = vmatprep.subr.mxu0 0.0
      %499 = vmatpush1.msra.mxu0 %v351
      %500 = vmatprep.subr.mxu0 0.0
      %501 = vmatpush1.msra.mxu0 %v352
      %502 = vmatprep.subr.mxu0 0.0
      %503 = vmatpush1.msra.mxu0 %v353
      %504 = vmatprep.subr.mxu0 0.0
      %505 = vmatpush1.msra.mxu0 %v354
      %506 = vmatprep.subr.mxu0 0.0
      %507 = vmatpush1.msra.mxu0 %v355
      %508 = vmatprep.subr.mxu0 0.0
      %509 = vmatpush1.msra.mxu0 %v356
      %510 = vmatprep.mubr.f32.mxu0 %v286
      %511 = vmatmul.mubr.f32.gmra.mrb[0].mxu0 %v285
      %v512 = vpop.f32.mrb[0].mxu0
      %v513 = vadd.f32 %v438, %v512
      %v514 = vpop.f32.mrb[0].mxu0
      %515 = vmatprep.mubr.f32.mxu0 %v291
      %516 = vmatmul.mubr.f32.gmra.mrb[0].mxu0 %v290
      %v517 = vpop.f32.mrb[0].mxu0
      %v518 = vadd.f32 %v443, %v517
      %v519 = vpop.f32.mrb[0].mxu0
      %520 = vdwg.mxu0
      %521 = vmatprep.subr.mxu0 0.0
      %522 = vmatpush1.msra.mxu0 %v357
      %523 = vmatprep.subr.mxu0 0.0
      %524 = vmatpush1.msra.mxu0 %v358
      %525 = vmatprep.subr.mxu0 0.0
      %526 = vmatpush1.msra.mxu0 %v359
      %527 = vmatprep.subr.mxu0 0.0
      %528 = vmatpush1.msra.mxu0 %v360
      %529 = vmatprep.subr.mxu0 0.0
      %530 = vmatpush1.msra.mxu0 %v361
      %531 = vmatprep.subr.mxu0 0.0
      %532 = vmatpush1.msra.mxu0 %v362
      %533 = vmatprep.subr.mxu0 0.0
      %534 = vmatpush1.msra.mxu0 %v363
      %535 = vmatprep.subr.mxu0 0.0
      %536 = vmatpush1.msra.mxu0 %v364
      %537 = vmatprep.subr.mxu0 0.0
      %538 = vmatpush1.msra.mxu0 0.0
      %539 = vmatprep.subr.mxu0 0.0
      %540 = vmatpush1.msra.mxu0 0.0
      %541 = vmatprep.subr.mxu0 0.0
      %542 = vmatpush1.msra.mxu0 0.0
      %543 = vmatprep.subr.mxu0 0.0
      %544 = vmatpush1.msra.mxu0 0.0
      %545 = vmatprep.subr.mxu0 0.0
      %546 = vmatpush1.msra.mxu0 0.0
      %547 = vmatprep.subr.mxu0 0.0
      %548 = vmatpush1.msra.mxu0 0.0
      %549 = vmatprep.subr.mxu0 0.0
      %550 = vmatpush1.msra.mxu0 0.0
      %551 = vmatprep.subr.mxu0 0.0
      %552 = vmatpush1.msra.mxu0 0.0
      %553 = vmatprep.subr.mxu0 0.0
      %554 = vmatpush1.msra.mxu0 0.0
      %555 = vmatprep.subr.mxu0 0.0
      %556 = vmatpush1.msra.mxu0 0.0
      %557 = vmatprep.subr.mxu0 0.0
      %558 = vmatpush1.msra.mxu0 0.0
      %559 = vmatprep.subr.mxu0 0.0
      %560 = vmatpush1.msra.mxu0 0.0
      %561 = vmatprep.subr.mxu0 0.0
      %562 = vmatpush1.msra.mxu0 0.0
      %563 = vmatprep.subr.mxu0 0.0
      %564 = vmatpush1.msra.mxu0 0.0
      %565 = vmatprep.subr.mxu0 0.0
      %566 = vmatpush1.msra.mxu0 0.0
      %567 = vmatprep.subr.mxu0 0.0
      %568 = vmatpush1.msra.mxu0 0.0
      %569 = vmatprep.subr.mxu0 0.0
      %570 = vmatpush1.msra.mxu0 0.0
      %571 = vmatprep.subr.mxu0 0.0
      %572 = vmatpush1.msra.mxu0 0.0
      %573 = vmatprep.subr.mxu0 0.0
      %574 = vmatpush1.msra.mxu0 0.0
      %575 = vmatprep.subr.mxu0 0.0
      %576 = vmatpush1.msra.mxu0 0.0
      %577 = vmatprep.subr.mxu0 0.0
      %578 = vmatpush1.msra.mxu0 0.0
      %579 = vmatprep.subr.mxu0 0.0
      %580 = vmatpush1.msra.mxu0 0.0
      %581 = vmatprep.subr.mxu0 0.0
      %582 = vmatpush1.msra.mxu0 0.0
      %583 = vmatprep.subr.mxu0 0.0
      %584 = vmatpush1.msra.mxu0 0.0
      %585 = vmatprep.mubr.f32.mxu0 0.0
      %586 = vmatmul.mubr.f32.gmra.mrb[0].mxu0 %v366
      %v587 = vpop.f32.mrb[0].mxu0
      %v588 = vadd.f32 %v513, %v587
      %v589 = vpop.f32.mrb[0].mxu0
      %590 = vmatprep.mubr.f32.mxu0 0.0
      %591 = vmatmul.mubr.f32.gmra.mrb[0].mxu0 %v369
      %v592 = vpop.f32.mrb[0].mxu0
      %v593 = vadd.f32 %v518, %v592
      %v594 = vpop.f32.mrb[0].mxu0
      %595 = vdwg.mxu0
      %v596 = vmax.f32 %v588, 0.0
      %v597 = vmax.f32 %v593, 0.0
      %600 = vrot.lane.b32.xlu0 %v596, 4
      %v601 = vpop.permute.xlu0 %600
      %602 = vrot.lane.b32.xlu0 %v597, 4
      %v603 = vpop.permute.xlu0 %602
      %606 = vst.msk [vmem:[#allocation2 + $0x1] sm:$0xff] %vm186, %v601
      %607 = vst.msk [vmem:[#allocation2 + $0x9] sm:$0xff] %vm186, %v603
      %v608 = vld [vmem:[#allocation2] sm:$0xff]
      %v609 = vld [vmem:[#allocation2 + $0x8] sm:$0xff]
      %610 = vst.msk [vmem:[#allocation3] sm:$0xff] %vm191, %v608
      %611 = vst.msk [vmem:[#allocation3 + $0x28] sm:$0xff] %vm191, %v609
      %v612 = vld [vmem:[#allocation2] sm:$0xff]
      %v613 = vld [vmem:[#allocation2 + $0x8] sm:$0xff]
      %616 = vrot.lane.b32.xlu0 %v612, 60
      %v617 = vpop.permute.xlu0 %616
      %618 = vrot.lane.b32.xlu0 %v613, 60
      %v619 = vpop.permute.xlu0 %618
      %622 = vst.msk [vmem:[#allocation3] sm:$0xff] %vm204, %v617
      %623 = vst.msk [vmem:[#allocation3 + $0x28] sm:$0xff] %vm204, %v619
      %v624 = vld [vmem:[#allocation2] sm:$0xff]
      %v625 = vld [vmem:[#allocation2 + $0x8] sm:$0xff]
      %628 = vrot.lane.b32.xlu0 %v624, 120
      %v629 = vpop.permute.xlu0 %628
      %630 = vrot.lane.b32.xlu0 %v625, 120
      %v631 = vpop.permute.xlu0 %630
      %634 = vst.msk [vmem:[#allocation3 + $0x8] sm:$0xff] %vm191, %v629
      %635 = vst.msk [vmem:[#allocation3 + $0x30] sm:$0xff] %vm191, %v631
      %v636 = vld [vmem:[#allocation2 + $0x1] sm:$0xff]
      %v637 = vld [vmem:[#allocation2 + $0x9] sm:$0xff]
      %640 = vrot.lane.b32.xlu0 %v636, 64
      %v641 = vpop.permute.xlu0 %640
      %642 = vrot.lane.b32.xlu0 %v637, 64
      %v643 = vpop.permute.xlu0 %642
      %646 = vst.msk [vmem:[#allocation3 + $0x8] sm:$0xff] %vm204, %v641
      %647 = vst.msk [vmem:[#allocation3 + $0x30] sm:$0xff] %vm204, %v643
      %v648 = vld [vmem:[#allocation2 + $0x1] sm:$0xff]
      %v649 = vld [vmem:[#allocation2 + $0x9] sm:$0xff]
      %652 = vrot.lane.b32.xlu0 %v648, 124
      %v653 = vpop.permute.xlu0 %652
      %654 = vrot.lane.b32.xlu0 %v649, 124
      %v655 = vpop.permute.xlu0 %654
      %658 = vst.msk [vmem:[#allocation3 + $0x10] sm:$0xff] %vm191, %v653
      %659 = vst.msk [vmem:[#allocation3 + $0x38] sm:$0xff] %vm191, %v655
      %v660 = vld [vmem:[#allocation2 + $0x1] sm:$0xff]
      %v661 = vld [vmem:[#allocation2 + $0x9] sm:$0xff]
      %664 = vrot.lane.b32.xlu0 %v660, 56
      %v665 = vpop.permute.xlu0 %664
      %666 = vrot.lane.b32.xlu0 %v661, 56
      %v667 = vpop.permute.xlu0 %666
      %670 = vst.msk [vmem:[#allocation3 + $0x10] sm:$0xff] %vm204, %v665
      %671 = vst.msk [vmem:[#allocation3 + $0x38] sm:$0xff] %vm204, %v667
      %v672 = vld [vmem:[#allocation2 + $0x2] sm:$0xff]
      %v673 = vld [vmem:[#allocation2 + $0xa] sm:$0xff]
      %674 = vst.msk [vmem:[#allocation3 + $0x18] sm:$0xff] %vm191, %v672
      %675 = vst.msk [vmem:[#allocation3 + $0x40] sm:$0xff] %vm191, %v673
      %v676 = vld [vmem:[#allocation2 + $0x2] sm:$0xff]
      %v677 = vld [vmem:[#allocation2 + $0xa] sm:$0xff]
      %680 = vrot.lane.b32.xlu0 %v676, 60
      %v681 = vpop.permute.xlu0 %680
      %682 = vrot.lane.b32.xlu0 %v677, 60
      %v683 = vpop.permute.xlu0 %682
      %686 = vst.msk [vmem:[#allocation3 + $0x18] sm:$0xff] %vm204, %v681
      %687 = vst.msk [vmem:[#allocation3 + $0x40] sm:$0xff] %vm204, %v683
      %v688 = vld [vmem:[#allocation2 + $0x2] sm:$0xff]
      %v689 = vld [vmem:[#allocation2 + $0xa] sm:$0xff]
      %692 = vrot.lane.b32.xlu0 %v688, 120
      %v693 = vpop.permute.xlu0 %692
      %694 = vrot.lane.b32.xlu0 %v689, 120
      %v695 = vpop.permute.xlu0 %694
      %698 = vst.msk [vmem:[#allocation3 + $0x20] sm:$0xff] %vm191, %v693
      %699 = vst.msk [vmem:[#allocation3 + $0x48] sm:$0xff] %vm191, %v695
      %v700 = vld [vmem:[#allocation3] sm:$0xff]
      %v701 = vld [vmem:[#allocation3 + $0x8] sm:$0xff]
      %v702 = vld [vmem:[#allocation3 + $0x10] sm:$0xff]
      %v703 = vld [vmem:[#allocation3 + $0x18] sm:$0xff]
      %v704 = vld [vmem:[#allocation3 + $0x20] sm:$0xff]
      %v705 = vld [vmem:[#allocation3 + $0x28] sm:$0xff]
      %v706 = vld [vmem:[#allocation3 + $0x30] sm:$0xff]
      %v707 = vld [vmem:[#allocation3 + $0x38] sm:$0xff]
      %v708 = vld [vmem:[#allocation3 + $0x40] sm:$0xff]
      %v709 = vld [vmem:[#allocation3 + $0x48] sm:$0xff]
      %v710 = vld [vmem:[%s2] sm:$0xff]
      %v711 = vld [vmem:[%s2 + $0x8] sm:$0xff]
      %v712 = vld [vmem:[%s2 + $0x10] sm:$0xff]
      %v713 = vld [vmem:[%s2 + $0x18] sm:$0xff]
      %v714 = vld [vmem:[%s2 + $0x20] sm:$0xff]
      %v715 = vld [vmem:[%s2 + $0x28] sm:$0xff]
      %v716 = vld [vmem:[%s2 + $0x30] sm:$0xff]
      %v717 = vld [vmem:[%s2 + $0x38] sm:$0xff]
      %v718 = vld [vmem:[%s2 + $0x40] sm:$0xff]
      %v719 = vld [vmem:[%s2 + $0x48] sm:$0xff]
      %v720 = vld [vmem:[%s2 + $0x50] sm:$0xff]
      %v721 = vld [vmem:[%s2 + $0x58] sm:$0xff]
      %v722 = vld [vmem:[%s2 + $0x60] sm:$0xff]
      %v723 = vld [vmem:[%s2 + $0x68] sm:$0xff]
      %v724 = vld [vmem:[%s2 + $0x70] sm:$0xff]
      %v725 = vld [vmem:[%s2 + $0x78] sm:$0xff]
      %v726 = vld [vmem:[%s2 + $0x80] sm:$0xff]
      %v727 = vld [vmem:[%s2 + $0x88] sm:$0xff]
      %v728 = vld [vmem:[%s2 + $0x90] sm:$0xff]
      %v729 = vld [vmem:[%s2 + $0x98] sm:$0xff]
      %v730 = vld [vmem:[%s2 + $0xa0] sm:$0xff]
      %v731 = vld [vmem:[%s2 + $0xa8] sm:$0xff]
      %v732 = vld [vmem:[%s2 + $0xb0] sm:$0xff]
      %v733 = vld [vmem:[%s2 + $0xb8] sm:$0xff]
      %v734 = vld [vmem:[%s2 + $0xc0] sm:$0xff]
      %v735 = vld [vmem:[%s2 + $0xc8] sm:$0xff]
      %v736 = vld [vmem:[%s2 + $0xd0] sm:$0xff]
      %v737 = vld [vmem:[%s2 + $0xd8] sm:$0xff]
      %v738 = vld [vmem:[%s2 + $0xe0] sm:$0xff]
      %v739 = vld [vmem:[%s2 + $0xe8] sm:$0xff]
      %v740 = vld [vmem:[%s2 + $0xf0] sm:$0xff]
      %v741 = vld [vmem:[%s2 + $0xf8] sm:$0xff]
      %v742 = vld [vmem:[%s2 + $0x100] sm:$0xff]
      %v743 = vld [vmem:[%s2 + $0x108] sm:$0xff]
      %v744 = vld [vmem:[%s2 + $0x110] sm:$0xff]
      %v745 = vld [vmem:[%s2 + $0x118] sm:$0xff]
      %v746 = vld [vmem:[%s2 + $0x120] sm:$0xff]
      %v747 = vld [vmem:[%s2 + $0x128] sm:$0xff]
      %v748 = vld [vmem:[%s2 + $0x130] sm:$0xff]
      %v749 = vld [vmem:[%s2 + $0x138] sm:$0xff]
      %v750 = vld [vmem:[%s2 + $0x140] sm:$0xff]
      %v751 = vld [vmem:[%s2 + $0x148] sm:$0xff]
      %v752 = vld [vmem:[%s2 + $0x150] sm:$0xff]
      %v753 = vld [vmem:[%s2 + $0x158] sm:$0xff]
      %v754 = vld [vmem:[%s2 + $0x160] sm:$0xff]
      %v755 = vld [vmem:[%s2 + $0x168] sm:$0xff]
      %v756 = vld [vmem:[%s2 + $0x170] sm:$0xff]
      %v757 = vld [vmem:[%s2 + $0x178] sm:$0xff]
      %v758 = vld [vmem:[%s2 + $0x180] sm:$0xff]
      %v759 = vld [vmem:[%s2 + $0x188] sm:$0xff]
      %v760 = vld [vmem:[%s2 + $0x190] sm:$0xff]
      %v761 = vld [vmem:[%s2 + $0x198] sm:$0xff]
      %v762 = vld [vmem:[%s2 + $0x1a0] sm:$0xff]
      %v763 = vld [vmem:[%s2 + $0x1a8] sm:$0xff]
      %v764 = vld [vmem:[%s2 + $0x1b0] sm:$0xff]
      %v765 = vld [vmem:[%s2 + $0x1b8] sm:$0xff]
      %v766 = vld [vmem:[%s2 + $0x1c0] sm:$0xff]
      %v767 = vld [vmem:[%s2 + $0x1c8] sm:$0xff]
      %v768 = vld [vmem:[%s2 + $0x1d0] sm:$0xff]
      %v769 = vld [vmem:[%s2 + $0x1d8] sm:$0xff]
      %v770 = vld [vmem:[%s2 + $0x1e0] sm:$0xff]
      %v771 = vld [vmem:[%s2 + $0x1e8] sm:$0xff]
      %v772 = vld [vmem:[%s2 + $0x1f0] sm:$0xff]
      %v773 = vld [vmem:[%s2 + $0x1f8] sm:$0xff]
      %v774 = vld [vmem:[%s2 + $0x200] sm:$0xff]
      %v775 = vld [vmem:[%s2 + $0x208] sm:$0xff]
      %v776 = vld [vmem:[%s2 + $0x210] sm:$0xff]
      %v777 = vld [vmem:[%s2 + $0x218] sm:$0xff]
      %v778 = vld [vmem:[%s2 + $0x220] sm:$0xff]
      %v779 = vld [vmem:[%s2 + $0x228] sm:$0xff]
      %v780 = vld [vmem:[%s2 + $0x230] sm:$0xff]
      %v781 = vld [vmem:[%s2 + $0x238] sm:$0xff]
      %v783 = vsel %vm191, %v704, 0
      %v786 = vsel %vm191, %v709, 0
      %788 = vmatprep.subr.mxu0 0.0
      %789 = vmatpush1.msra.mxu0 %v710
      %790 = vmatprep.subr.mxu0 0.0
      %791 = vmatpush1.msra.mxu0 %v711
      %792 = vmatprep.subr.mxu0 0.0
      %793 = vmatpush1.msra.mxu0 %v712
      %794 = vmatprep.subr.mxu0 0.0
      %795 = vmatpush1.msra.mxu0 %v713
      %796 = vmatprep.subr.mxu0 0.0
      %797 = vmatpush1.msra.mxu0 %v714
      %798 = vmatprep.subr.mxu0 0.0
      %799 = vmatpush1.msra.mxu0 %v715
      %800 = vmatprep.subr.mxu0 0.0
      %801 = vmatpush1.msra.mxu0 %v716
      %802 = vmatprep.subr.mxu0 0.0
      %803 = vmatpush1.msra.mxu0 %v717
      %804 = vmatprep.subr.mxu0 0.0
      %805 = vmatpush1.msra.mxu0 %v718
      %806 = vmatprep.subr.mxu0 0.0
      %807 = vmatpush1.msra.mxu0 %v719
      %808 = vmatprep.subr.mxu0 0.0
      %809 = vmatpush1.msra.mxu0 %v720
      %810 = vmatprep.subr.mxu0 0.0
      %811 = vmatpush1.msra.mxu0 %v721
      %812 = vmatprep.subr.mxu0 0.0
      %813 = vmatpush1.msra.mxu0 %v722
      %814 = vmatprep.subr.mxu0 0.0
      %815 = vmatpush1.msra.mxu0 %v723
      %816 = vmatprep.subr.mxu0 0.0
      %817 = vmatpush1.msra.mxu0 %v724
      %818 = vmatprep.subr.mxu0 0.0
      %819 = vmatpush1.msra.mxu0 %v725
      %820 = vmatprep.subr.mxu0 0.0
      %821 = vmatpush1.msra.mxu0 %v726
      %822 = vmatprep.subr.mxu0 0.0
      %823 = vmatpush1.msra.mxu0 %v727
      %824 = vmatprep.subr.mxu0 0.0
      %825 = vmatpush1.msra.mxu0 %v728
      %826 = vmatprep.subr.mxu0 0.0
      %827 = vmatpush1.msra.mxu0 %v729
      %828 = vmatprep.subr.mxu0 0.0
      %829 = vmatpush1.msra.mxu0 %v730
      %830 = vmatprep.subr.mxu0 0.0
      %831 = vmatpush1.msra.mxu0 %v731
      %832 = vmatprep.subr.mxu0 0.0
      %833 = vmatpush1.msra.mxu0 %v732
      %834 = vmatprep.subr.mxu0 0.0
      %835 = vmatpush1.msra.mxu0 %v733
      %836 = vmatprep.subr.mxu0 0.0
      %837 = vmatpush1.msra.mxu0 %v734
      %838 = vmatprep.subr.mxu0 0.0
      %839 = vmatpush1.msra.mxu0 %v735
      %840 = vmatprep.subr.mxu0 0.0
      %841 = vmatpush1.msra.mxu0 %v736
      %842 = vmatprep.subr.mxu0 0.0
      %843 = vmatpush1.msra.mxu0 %v737
      %844 = vmatprep.subr.mxu0 0.0
      %845 = vmatpush1.msra.mxu0 %v738
      %846 = vmatprep.subr.mxu0 0.0
      %847 = vmatpush1.msra.mxu0 %v739
      %848 = vmatprep.subr.mxu0 0.0
      %849 = vmatpush1.msra.mxu0 %v740
      %850 = vmatprep.subr.mxu0 0.0
      %851 = vmatpush1.msra.mxu0 %v741
      %852 = vmatprep.mubr.f32.mxu0 %v701
      %853 = vmatmul.mubr.f32.gmra.mrb[0].mxu0 %v700
      %v854 = vpop.f32.mrb[0].mxu0
      %v855 = vadd.f32 %v176, %v854
      %v856 = vpop.f32.mrb[0].mxu0
      %857 = vmatprep.mubr.f32.mxu0 %v706
      %858 = vmatmul.mubr.f32.gmra.mrb[0].mxu0 %v705
      %v859 = vpop.f32.mrb[0].mxu0
      %v860 = vadd.f32 %v177, %v859
      %v861 = vpop.f32.mrb[0].mxu0
      %862 = vdwg.mxu0
      %863 = vmatprep.subr.mxu0 0.0
      %864 = vmatpush1.msra.mxu0 %v742
      %865 = vmatprep.subr.mxu0 0.0
      %866 = vmatpush1.msra.mxu0 %v743
      %867 = vmatprep.subr.mxu0 0.0
      %868 = vmatpush1.msra.mxu0 %v744
      %869 = vmatprep.subr.mxu0 0.0
      %870 = vmatpush1.msra.mxu0 %v745
      %871 = vmatprep.subr.mxu0 0.0
      %872 = vmatpush1.msra.mxu0 %v746
      %873 = vmatprep.subr.mxu0 0.0
      %874 = vmatpush1.msra.mxu0 %v747
      %875 = vmatprep.subr.mxu0 0.0
      %876 = vmatpush1.msra.mxu0 %v748
      %877 = vmatprep.subr.mxu0 0.0
      %878 = vmatpush1.msra.mxu0 %v749
      %879 = vmatprep.subr.mxu0 0.0
      %880 = vmatpush1.msra.mxu0 %v750
      %881 = vmatprep.subr.mxu0 0.0
      %882 = vmatpush1.msra.mxu0 %v751
      %883 = vmatprep.subr.mxu0 0.0
      %884 = vmatpush1.msra.mxu0 %v752
      %885 = vmatprep.subr.mxu0 0.0
      %886 = vmatpush1.msra.mxu0 %v753
      %887 = vmatprep.subr.mxu0 0.0
      %888 = vmatpush1.msra.mxu0 %v754
      %889 = vmatprep.subr.mxu0 0.0
      %890 = vmatpush1.msra.mxu0 %v755
      %891 = vmatprep.subr.mxu0 0.0
      %892 = vmatpush1.msra.mxu0 %v756
      %893 = vmatprep.subr.mxu0 0.0
      %894 = vmatpush1.msra.mxu0 %v757
      %895 = vmatprep.subr.mxu0 0.0
      %896 = vmatpush1.msra.mxu0 %v758
      %897 = vmatprep.subr.mxu0 0.0
      %898 = vmatpush1.msra.mxu0 %v759
      %899 = vmatprep.subr.mxu0 0.0
      %900 = vmatpush1.msra.mxu0 %v760
      %901 = vmatprep.subr.mxu0 0.0
      %902 = vmatpush1.msra.mxu0 %v761
      %903 = vmatprep.subr.mxu0 0.0
      %904 = vmatpush1.msra.mxu0 %v762
      %905 = vmatprep.subr.mxu0 0.0
      %906 = vmatpush1.msra.mxu0 %v763
      %907 = vmatprep.subr.mxu0 0.0
      %908 = vmatpush1.msra.mxu0 %v764
      %909 = vmatprep.subr.mxu0 0.0
      %910 = vmatpush1.msra.mxu0 %v765
      %911 = vmatprep.subr.mxu0 0.0
      %912 = vmatpush1.msra.mxu0 %v766
      %913 = vmatprep.subr.mxu0 0.0
      %914 = vmatpush1.msra.mxu0 %v767
      %915 = vmatprep.subr.mxu0 0.0
      %916 = vmatpush1.msra.mxu0 %v768
      %917 = vmatprep.subr.mxu0 0.0
      %918 = vmatpush1.msra.mxu0 %v769
      %919 = vmatprep.subr.mxu0 0.0
      %920 = vmatpush1.msra.mxu0 %v770
      %921 = vmatprep.subr.mxu0 0.0
      %922 = vmatpush1.msra.mxu0 %v771
      %923 = vmatprep.subr.mxu0 0.0
      %924 = vmatpush1.msra.mxu0 %v772
      %925 = vmatprep.subr.mxu0 0.0
      %926 = vmatpush1.msra.mxu0 %v773
      %927 = vmatprep.mubr.f32.mxu0 %v703
      %928 = vmatmul.mubr.f32.gmra.mrb[0].mxu0 %v702
      %v929 = vpop.f32.mrb[0].mxu0
      %v930 = vadd.f32 %v855, %v929
      %v931 = vpop.f32.mrb[0].mxu0
      %932 = vmatprep.mubr.f32.mxu0 %v708
      %933 = vmatmul.mubr.f32.gmra.mrb[0].mxu0 %v707
      %v934 = vpop.f32.mrb[0].mxu0
      %v935 = vadd.f32 %v860, %v934
      %v936 = vpop.f32.mrb[0].mxu0
      %937 = vdwg.mxu0
      %938 = vmatprep.subr.mxu0 0.0
      %939 = vmatpush1.msra.mxu0 %v774
      %940 = vmatprep.subr.mxu0 0.0
      %941 = vmatpush1.msra.mxu0 %v775
      %942 = vmatprep.subr.mxu0 0.0
      %943 = vmatpush1.msra.mxu0 %v776
      %944 = vmatprep.subr.mxu0 0.0
      %945 = vmatpush1.msra.mxu0 %v777
      %946 = vmatprep.subr.mxu0 0.0
      %947 = vmatpush1.msra.mxu0 %v778
      %948 = vmatprep.subr.mxu0 0.0
      %949 = vmatpush1.msra.mxu0 %v779
      %950 = vmatprep.subr.mxu0 0.0
      %951 = vmatpush1.msra.mxu0 %v780
      %952 = vmatprep.subr.mxu0 0.0
      %953 = vmatpush1.msra.mxu0 %v781
      %954 = vmatprep.subr.mxu0 0.0
      %955 = vmatpush1.msra.mxu0 0.0
      %956 = vmatprep.subr.mxu0 0.0
      %957 = vmatpush1.msra.mxu0 0.0
      %958 = vmatprep.subr.mxu0 0.0
      %959 = vmatpush1.msra.mxu0 0.0
      %960 = vmatprep.subr.mxu0 0.0
      %961 = vmatpush1.msra.mxu0 0.0
      %962 = vmatprep.subr.mxu0 0.0
      %963 = vmatpush1.msra.mxu0 0.0
      %964 = vmatprep.subr.mxu0 0.0
      %965 = vmatpush1.msra.mxu0 0.0
      %966 = vmatprep.subr.mxu0 0.0
      %967 = vmatpush1.msra.mxu0 0.0
      %968 = vmatprep.subr.mxu0 0.0
      %969 = vmatpush1.msra.mxu0 0.0
      %970 = vmatprep.subr.mxu0 0.0
      %971 = vmatpush1.msra.mxu0 0.0
      %972 = vmatprep.subr.mxu0 0.0
      %973 = vmatpush1.msra.mxu0 0.0
      %974 = vmatprep.subr.mxu0 0.0
      %975 = vmatpush1.msra.mxu0 0.0
      %976 = vmatprep.subr.mxu0 0.0
      %977 = vmatpush1.msra.mxu0 0.0
      %978 = vmatprep.subr.mxu0 0.0
      %979 = vmatpush1.msra.mxu0 0.0
      %980 = vmatprep.subr.mxu0 0.0
      %981 = vmatpush1.msra.mxu0 0.0
      %982 = vmatprep.subr.mxu0 0.0
      %983 = vmatpush1.msra.mxu0 0.0
      %984 = vmatprep.subr.mxu0 0.0
      %985 = vmatpush1.msra.mxu0 0.0
      %986 = vmatprep.subr.mxu0 0.0
      %987 = vmatpush1.msra.mxu0 0.0
      %988 = vmatprep.subr.mxu0 0.0
      %989 = vmatpush1.msra.mxu0 0.0
      %990 = vmatprep.subr.mxu0 0.0
      %991 = vmatpush1.msra.mxu0 0.0
      %992 = vmatprep.subr.mxu0 0.0
      %993 = vmatpush1.msra.mxu0 0.0
      %994 = vmatprep.subr.mxu0 0.0
      %995 = vmatpush1.msra.mxu0 0.0
      %996 = vmatprep.subr.mxu0 0.0
      %997 = vmatpush1.msra.mxu0 0.0
      %998 = vmatprep.subr.mxu0 0.0
      %999 = vmatpush1.msra.mxu0 0.0
      %1000 = vmatprep.subr.mxu0 0.0
      %1001 = vmatpush1.msra.mxu0 0.0
      %1002 = vmatprep.mubr.f32.mxu0 0.0
      %1003 = vmatmul.mubr.f32.gmra.mrb[0].mxu0 %v783
      %v1004 = vpop.f32.mrb[0].mxu0
      %v1005 = vadd.f32 %v930, %v1004
      %v1006 = vpop.f32.mrb[0].mxu0
      %1007 = vmatprep.mubr.f32.mxu0 0.0
      %1008 = vmatmul.mubr.f32.gmra.mrb[0].mxu0 %v786
      %v1009 = vpop.f32.mrb[0].mxu0
      %v1010 = vadd.f32 %v935, %v1009
      %v1011 = vpop.f32.mrb[0].mxu0
      %1012 = vdwg.mxu0
      %v1013 = vmax.f32 %v1005, 0.0
      %v1014 = vmax.f32 %v1010, 0.0
      %1015 = vst.msk [vmem:[%s170] sm:$0xff] %vm191, %v1013
      %1016 = vst.msk [vmem:[%s170 + $0x8] sm:$0xff] %vm191, %v1014
      %p1017 = scmp.lt.s32.totalorder %s14, 1
      %s1018 = scalar_select %p1017, %s14, 1
      %s1019 = smul.addr %s1018, 2
      %s1020 = smul.addr %s1019, 8
      %s1021 = scalar_lea.vmem %s3, %s1020
      // Predicated region
      $region33: #{basic_decode_block.1} parent=31 // pred_check
        %p1022 = pneg %p100
      $region34: #{basic_decode_block.1} parent=31 // pred_check_branch
        %1024 = sbr.rel (%p1022) target = $region36
      $region35: #{basic_decode_block.1} parent=31 // pred_region
        _
      $region36: #{basic_decode_block.1} parent=31 // pred_fallthru
        _
    $region32: #{basic_decode_block.1} parent=5 // pred_fallthru
      _
    %p1025 = scmp.le.s32.totalorder 2, %s9
    // Predicated region
    $region37: #{basic_decode_block.1} parent=5 // pred_check
      %p1026 = pneg %p1025
    $region38: #{basic_decode_block.1} parent=5 // pred_check_branch
      %1028 = sbr.rel (%p1026) target = $region40
    $region39: #{basic_decode_block.1} parent=5 // pred_region
      %s1029 = ssub.s32 %s9, 2
      // Predicated region
      $region41: #{basic_decode_block.1} parent=39 // pred_check
        %p1030 = pneg %p106
      $region42: #{basic_decode_block.1} parent=39 // pred_check_branch
        %1032 = sbr.rel (%p1030) target = $region44
      $region43: #{basic_decode_block.1} parent=39 // pred_region
        %p1033 = scmp.lt.s32.totalorder %s15, 1
        %s1034 = scalar_select %p1033, %s15, 1
        %s1035 = smul.addr %s1034, 2
        %s1036 = smul.addr %s1035, 8
        %s1037 = scalar_lea.vmem %s3, %s1036
      $region44: #{basic_decode_block.1} parent=39 // pred_fallthru
        _
    $region40: #{basic_decode_block.1} parent=5 // pred_fallthru
      _
  $region6: #{basic_decode_block.1} parent=0 // loop_footer
    %s13 = sadd.s32 1, %s9
  $region7: #{basic_decode_block.1} parent=0 // loop_footer_branch
    %8 = sbr.rel target = $region3
  $region8: #{basic_decode_block.1} parent=0 // loop_exit
    _

</llo_original>
